<compile_context>
chip_gen: v5e
topology: v5e:2x2
jax: 0.10.0
libtpu: 0.0.40
codegen_flags: <defaults>
</compile_context>

<pallas_src>
import functools

import jax
import jax.numpy as jnp
from jax import lax
from jax.experimental import pallas as pl
from jax.experimental.pallas import tpu as pltpu

BN_EPS = 1e-5


# ---------------------------------------------------------------------------
# Pallas kernel factory (static config: downsample / supplement)
# ---------------------------------------------------------------------------
def _make_kernel(downsample, supplement):
    def kernel(*refs):
        refs = list(refs)
        llast_ref = refs.pop(0)
        supp_ref = refs.pop(0) if supplement else None
        x_ref = refs.pop(0)
        w1_ref = refs.pop(0)
        c_ref = refs.pop(0)            # (8, W*Cout) f32: 0=b1, 1=s3, 2=t3, 3=b2
        if downsample:
            amat_a_ref, amat_b_ref, cmat_ref, xout_ref, lnext_ref = refs
        else:
            xout_ref, lnext_ref = refs

        # 1x1 conv with BN1 pre-folded (block-diagonal weight keeps the result
        # in the lane-dense (rows, W*Cout) layout), then ReLU.
        lin = jnp.dot(llast_ref[...], w1_ref[...],
                      preferred_element_type=jnp.float32)
        lin = jnp.maximum(lin + c_ref[0:1, :], 0.0)

        # Supplement branch: conv3x3 (x BN2 scale) computed by XLA upstream;
        # the bias/BN shift and ReLU are fused here.
        if supplement:
            lin = lin + jnp.maximum(
                supp_ref[...].astype(jnp.float32) + c_ref[3:4, :], 0.0)

        s = x_ref[...].astype(jnp.float32) + lin           # x + Lin
        xout_ref[...] = (s * c_ref[1:2, :] + c_ref[2:3, :]).astype(xout_ref.dtype)

        if downsample:
            # Lnext = LL(x + Lin): column-pair matmul, then two row-pair
            # matmuls whose results are lane-packed (two LL rows per output
            # row) so the Lnext store stream is 128-lane dense.
            s_h = s.astype(cmat_ref.dtype)
            tmp = jnp.dot(s_h, cmat_ref[...],
                          preferred_element_type=jnp.float32)
            tmp = tmp.astype(amat_a_ref.dtype)
            lla = jnp.dot(amat_a_ref[...], tmp,
                          preferred_element_type=jnp.float32)   # LL rows 2r
            llb = jnp.dot(amat_b_ref[...], tmp,
                          preferred_element_type=jnp.float32)   # LL rows 2r+1
            half = lla.shape[-1]
            lnext_ref[:, :half] = lla.astype(lnext_ref.dtype)
            lnext_ref[:, half:] = llb.astype(lnext_ref.dtype)
        else:
            lnext_ref[...] = s.astype(lnext_ref.dtype)

    return kernel


# ---------------------------------------------------------------------------
# Parameters
# ---------------------------------------------------------------------------
def init_params(key, in_channels, out_channels):
    ks = jax.random.split(key, 16)
    p = {
        'w1': jax.random.normal(ks[0], (out_channels, in_channels, 1, 1), jnp.float32) * 0.3,
        'b1': jax.random.normal(ks[1], (out_channels,), jnp.float32) * 0.1,
        'w2': jax.random.normal(ks[2], (out_channels, 3, 3, 3), jnp.float32) * 0.2,
        'b2': jax.random.normal(ks[3], (out_channels,), jnp.float32) * 0.1,
    }
    for i, name in enumerate(['bninput', 'bnsupplement', 'bnx']):
        base = 4 + 4 * i
        p[name] = dict(
            gamma=1.0 + 0.1 * jax.random.normal(ks[base], (out_channels,), jnp.float32),
            beta=0.1 * jax.random.normal(ks[base + 1], (out_channels,), jnp.float32),
            mean=0.1 * jax.random.normal(ks[base + 2], (out_channels,), jnp.float32),
            var=jax.random.uniform(ks[base + 3], (out_channels,), jnp.float32, 0.5, 1.5),
        )
    return p


def _bn_fold(bn):
    scale = bn['gamma'] / jnp.sqrt(bn['var'] + BN_EPS)
    shift = bn['beta'] - bn['mean'] * scale
    return scale, shift


# ---------------------------------------------------------------------------
# Hardware-aware tiling helpers
# ---------------------------------------------------------------------------
@functools.lru_cache(maxsize=1)
def _vmem_capacity_bytes():
    try:
        info = pltpu.get_tpu_info()
        cap = getattr(info, "vmem_capacity_bytes", None)
        if cap:
            return int(cap)
    except Exception:
        pass
    return 64 * 1024 * 1024          # conservative fallback = v7x physical VMEM


def _choose_row_tile(padded_rows, granule, stream_bytes_per_row, out_bytes_per_row,
                     const_bytes, downsample, haar_itemsize, budget_bytes,
                     max_tile=2048):
    """Largest row tile (multiple of `granule`, dividing padded_rows) whose
    double-buffered working set fits the budget; prefers >=2 grid steps so the
    row axis can pipeline and be split across v7x's two TensorCores."""
    cands = [t for t in range(granule, min(padded_rows, max_tile) + 1, granule)
             if padded_rows % t == 0]
    if not cands:                      # unreachable: padded_rows is a granule multiple
        cands = [granule]
    multi = [t for t in cands if 2 * t <= padded_rows]
    pool = multi if multi else cands

    def working_set(t):
        ws = 2 * t * (stream_bytes_per_row + out_bytes_per_row)   # double-buffered
        ws += 2 * const_bytes
        if downsample:
            ws += 2 * 2 * (t // 4) * t * haar_itemsize            # amat_a/b, O(t^2)
        return ws

    fitting = [t for t in pool if working_set(t) <= budget_bytes]
    return max(fitting) if fitting else min(pool)


# ---------------------------------------------------------------------------
# NHWC-native forward (the performant entry point — no layout transposes)
# ---------------------------------------------------------------------------
@functools.partial(jax.jit, static_argnames=("is_downsample", "is_supplement",
                                              "stream_dtype", "out_dtype"))
def block_lite_lite_forward(Llast, original, x, params, is_downsample=True,
                            is_supplement=True, stream_dtype=jnp.bfloat16,
                            out_dtype=None):
    """Inputs/outputs in NHWC.  Returns (x_out, Lnext)."""
    if out_dtype is None:
        out_dtype = stream_dtype
    N, H, W, Cin = Llast.shape
    Cout = x.shape[-1]
    f32 = jnp.float32

    if is_downsample and (H % 2 or W % 2):
        # TODO(synk): odd spatial dims would need true periodization wrapping.
        raise ValueError("Haar downsample path assumes even H and W")

    s1, t1 = _bn_fold(params['bninput'])
    s3, t3 = _bn_fold(params['bnx'])

    # --- BN1 folded into the 1x1 conv; block-diagonal weight so the matmul
    #     runs directly in the lane-dense (rows, W*C) layout. ----------------
    # TODO(synk): for non-"lite" widths, tile the W axis with a second grid
    # dim instead of the O(W^2) kron weight.
    w1 = params['w1'].reshape(Cout, Cin).astype(f32)
    w1f = (w1 * s1[:, None]).T                                   # (Cin, Cout)
    b1f = params['b1'].astype(f32) * s1 + t1                     # (Cout,)
    w1blk = jnp.kron(jnp.eye(W, dtype=f32), w1f).astype(stream_dtype)

    # Per-channel constants packed into ONE sublane-aligned (8, W*Cout) ref.
    consts = jnp.zeros((8, W * Cout), f32)
    consts = consts.at[0].set(jnp.tile(b1f, W))
    consts = consts.at[1].set(jnp.tile(s3, W))
    consts = consts.at[2].set(jnp.tile(t3, W))

    # --- activations: NHWC -> lane-dense 2-D slabs (reshape is free). -------
    rows = N * H
    llast2d = Llast.reshape(rows, W * Cin).astype(stream_dtype)
    x2d = x.reshape(rows, W * Cout).astype(stream_dtype)

    operands = [llast2d]
    if is_supplement:
        s2, t2 = _bn_fold(params['bnsupplement'])
        w2f = params['w2'].astype(f32) * s2[:, None, None, None]     # OIHW, BN2 scale folded
        b2f = params['b2'].astype(f32) * s2 + t2
        consts = consts.at[3].set(jnp.tile(b2f, W))
        # TODO(synk): full in-kernel fusion of this 3x3/3-channel conv (1-row
        # halo) would also remove the supp HBM round trip; for now XLA's native
        # NHWC conv produces the scaled pre-bias activations and the Pallas
        # kernel fuses bias/BN shift + ReLU.
        supp = lax.conv_general_dilated(
            original.astype(stream_dtype),
            jnp.transpose(w2f, (2, 3, 1, 0)).astype(stream_dtype),   # HWIO
            window_strides=(1, 1), padding=((1, 1), (1, 1)),
            dimension_numbers=('NHWC', 'HWIO', 'NHWC'),
            preferred_element_type=f32)
        operands.append(supp.reshape(rows, W * Cout).astype(stream_dtype))
    operands.append(x2d)

    # Pad rows so an aligned tile always exists (no full-extent fallback).
    granule = 32 if is_downsample else 16
    padded_rows = -(-rows // granule) * granule
    if padded_rows != rows:
        pad = padded_rows - rows
        operands = [jnp.pad(op, ((0, pad), (0, 0))) for op in operands]

    operands += [w1blk, consts]

    # --- tile sizing (double-buffering + O(th^2) amat accounted for) --------
    sb = jnp.dtype(stream_dtype).itemsize
    ob = jnp.dtype(out_dtype).itemsize
    stream_row = W * (Cin + (2 if is_supplement else 1) * Cout) * sb
    out_row = ((W * Cout) + (W * Cout) // 4) * ob if is_downsample else 2 * W * Cout * ob
    const_bytes = (W * Cin) * (W * Cout) * sb + 8 * (W * Cout) * 4
    if is_downsample:
        const_bytes += (W * Cout) * ((W // 2) * Cout) * sb

    phys_vmem = _vmem_capacity_bytes()
    vmem_limit = int(min(phys_vmem // 2, 96 * 1024 * 1024))
    th = _choose_row_tile(padded_rows, granule, stream_row, out_row, const_bytes,
                          is_downsample, sb, int(0.6 * vmem_limit))
    grid = (padded_rows // th,)

    def row_spec(width):
        return pl.BlockSpec((th, width), lambda i: (i, 0))

    def const_spec(r, c):
        return pl.BlockSpec((r, c), lambda i: (0, 0))

    in_specs = [row_spec(W * Cin)]
    if is_supplement:
        in_specs.append(row_spec(W * Cout))
    in_specs += [row_spec(W * Cout),
                 const_spec(W * Cin, W * Cout),
                 const_spec(8, W * Cout)]

    if is_downsample:
        # Tile boundaries must land on row-quads / even image rows for the
        # packed Haar pairing (th mult of 4, H even => both hold).
        assert th % 4 == 0 and H % 2 == 0 and rows % 2 == 0
        hd = stream_dtype            # 0/1/0.5 entries are exact in bf16
        amat_a = jnp.kron(jnp.eye(th // 4, dtype=f32),
                          jnp.array([[1., 1., 0., 0.]], f32)).astype(hd)
        amat_b = jnp.kron(jnp.eye(th // 4, dtype=f32),
                          jnp.array([[0., 0., 1., 1.]], f32)).astype(hd)
        colp = jnp.kron(jnp.eye(W // 2, dtype=f32), jnp.ones((2, 1), f32))
        cmat = (0.5 * jnp.kron(colp, jnp.eye(Cout, dtype=f32))).astype(hd)
        operands += [amat_a, amat_b, cmat]
        in_specs += [const_spec(th // 4, th), const_spec(th // 4, th),
                     const_spec(W * Cout, (W // 2) * Cout)]
        out_shape = (jax.ShapeDtypeStruct((padded_rows, W * Cout), out_dtype),
                     jax.ShapeDtypeStruct((padded_rows // 4, W * Cout), out_dtype))
        out_specs = (row_spec(W * Cout),
                     pl.BlockSpec((th // 4, W * Cout), lambda i: (i, 0)))
    else:
        out_shape = (jax.ShapeDtypeStruct((padded_rows, W * Cout), out_dtype),
                     jax.ShapeDtypeStruct((padded_rows, W * Cout), out_dtype))
        out_specs = (row_spec(W * Cout), row_spec(W * Cout))

    xout2d, lnext2d = pl.pallas_call(
        _make_kernel(is_downsample, is_supplement),
        out_shape=out_shape,
        grid=grid,
        in_specs=in_specs,
        out_specs=out_specs,
        compiler_params=pltpu.CompilerParams(
            dimension_semantics=("parallel",),
            vmem_limit_bytes=vmem_limit),
    )(*operands)

    x_out = xout2d[:rows].reshape(N, H, W, Cout)
    if is_downsample:
        L = (W // 2) * Cout
        lnext = (lnext2d.reshape(padded_rows // 2, L)[:rows // 2]
                 .reshape(N, H // 2, W // 2, Cout))
    else:
        lnext = lnext2d[:rows].reshape(N, H, W, Cout)
    return x_out, lnext


# ---------------------------------------------------------------------------
# NCHW compatibility wrapper (matches the PyTorch module's layout; the
# transposes here are exactly the HBM traffic the NHWC entry point avoids)
# ---------------------------------------------------------------------------
def block_lite_lite_forward_nchw(Llast, original, x, params, **kwargs):
    to_nhwc = lambda a: jnp.transpose(a, (0, 2, 3, 1))
    from_nhwc = lambda a: jnp.transpose(a, (0, 3, 1, 2))
    xo, ln = block_lite_lite_forward(to_nhwc(Llast), to_nhwc(original),
                                     to_nhwc(x), params, **kwargs)
    return from_nhwc(xo), from_nhwc(ln)


# ---------------------------------------------------------------------------
# Pure-JAX reference (NCHW, mirrors the PyTorch module) for verification
# ---------------------------------------------------------------------------
def reference_forward(Llast, original, x, params, is_downsample=True,
                      is_supplement=True):
    def bn(z, p):
        g = p['gamma'][None, :, None, None]
        b = p['beta'][None, :, None, None]
        m = p['mean'][None, :, None, None]
        v = p['var'][None, :, None, None]
        return (z - m) / jnp.sqrt(v + BN_EPS) * g + b

    def conv(inp, w, b, pad):
        y = lax.conv_general_dilated(inp, w, (1, 1), pad,
                                     dimension_numbers=('NCHW', 'OIHW', 'NCHW'))
        return y + b[None, :, None, None]

    def dwt_ll(z):   # haar, periodization, J=1 -> LL band (Yh is discarded)
        return 0.5 * (z[:, :, 0::2, 0::2] + z[:, :, 0::2, 1::2]
                      + z[:, :, 1::2, 0::2] + z[:, :, 1::2, 1::2])

    lin = jax.nn.relu(bn(conv(Llast, params['w1'], params['b1'], 'VALID'),
                         params['bninput']))
    if is_supplement:
        supp = jax.nn.relu(bn(conv(original, params['w2'], params['b2'],
                                   [(1, 1), (1, 1)]), params['bnsupplement']))
        lin = lin + supp
    ori = x
    x_out = bn(x + lin, params['bnx'])
    if is_downsample:
        lin = dwt_ll(lin)
        ori = dwt_ll(ori)
    lnext = lin + ori
    return x_out, lnext


# ---------------------------------------------------------------------------
if __name__ == "__main__":
    key = jax.random.PRNGKey(0)
    k_l, k_o, k_x, k_p = jax.random.split(key, 4)

    N, Cin, Cout, H, W = 2, 4, 8, 16, 16
    Llast = jax.random.normal(k_l, (N, Cin, H, W), jnp.float32)
    original = jax.random.normal(k_o, (N, 3, H, W), jnp.float32)
    x = jax.random.normal(k_x, (N, Cout, H, W), jnp.float32)
    params = init_params(k_p, Cin, Cout)

    x_ref, lnext_ref = reference_forward(Llast, original, x, params, True)

    # f32 streams + f32 outputs (accuracy check)
    xo32, ln32 = block_lite_lite_forward_nchw(
        Llast, original, x, params, is_downsample=True,
        stream_dtype=jnp.float32, out_dtype=jnp.float32)
    jax.block_until_ready((xo32, ln32))
    assert xo32.shape == (N, Cout, H, W)
    assert ln32.shape == (N, Cout, H // 2, W // 2)
    assert jnp.allclose(xo32, x_ref, atol=2e-2, rtol=2e-2)
    assert jnp.allclose(ln32, lnext_ref, atol=2e-2, rtol=2e-2)

    # bf16 streams + bf16 outputs (default, bandwidth-optimized path)
    xo16, ln16 = block_lite_lite_forward_nchw(Llast, original, x, params,
                                              is_downsample=True)
    jax.block_until_ready((xo16, ln16))
    assert xo16.dtype == jnp.bfloat16 and ln16.dtype == jnp.bfloat16
    assert jnp.allclose(xo16.astype(jnp.float32), x_ref, atol=8e-2, rtol=8e-2)
    assert jnp.allclose(ln16.astype(jnp.float32), lnext_ref, atol=8e-2, rtol=8e-2)

    # no-downsample path
    x_ref_nd, lnext_ref_nd = reference_forward(Llast, original, x, params, False)
    xo_nd, ln_nd = block_lite_lite_forward_nchw(
        Llast, original, x, params, is_downsample=False,
        stream_dtype=jnp.float32, out_dtype=jnp.float32)
    jax.block_until_ready((xo_nd, ln_nd))
    assert ln_nd.shape == (N, Cout, H, W)
    assert jnp.allclose(xo_nd, x_ref_nd, atol=2e-2, rtol=2e-2)
    assert jnp.allclose(ln_nd, lnext_ref_nd, atol=2e-2, rtol=2e-2)

    print("KERNEL_OK")
</pallas_src>

<mosaic_0001>
module attributes {stable_mosaic.version = 11 : i64} {
  func.func @kernel(%arg0: i32, %arg1: memref<32x64xf32, #tpu.memory_space<vmem>>, %arg2: memref<32x128xf32, #tpu.memory_space<vmem>>, %arg3: memref<32x128xf32, #tpu.memory_space<vmem>>, %arg4: memref<64x128xf32, #tpu.memory_space<vmem>>, %arg5: memref<8x128xf32, #tpu.memory_space<vmem>>, %arg6: memref<8x32xf32, #tpu.memory_space<vmem>>, %arg7: memref<8x32xf32, #tpu.memory_space<vmem>>, %arg8: memref<128x64xf32, #tpu.memory_space<vmem>>, %arg9: memref<32x128xf32, #tpu.memory_space<vmem>>, %arg10: memref<8x128xf32, #tpu.memory_space<vmem>>) attributes {dimension_semantics = [#tpu.dimension_semantics<parallel>], iteration_bounds = array<i64: 1>, scalar_prefetch = 0 : i64, scratch_operands = 0 : i64, tpu.core_type = #tpu.core_type<tc>, window_params = [{transform_indices = @transform_0, window_bounds = array<i64: 32, 64>}, {transform_indices = @transform_1, window_bounds = array<i64: 32, 128>}, {transform_indices = @transform_2, window_bounds = array<i64: 32, 128>}, {pipeline_mode = #tpu.pipeline_mode<synchronous>, transform_indices = @transform_3, window_bounds = array<i64: 64, 128>}, {pipeline_mode = #tpu.pipeline_mode<synchronous>, transform_indices = @transform_4, window_bounds = array<i64: 8, 128>}, {pipeline_mode = #tpu.pipeline_mode<synchronous>, transform_indices = @transform_5, window_bounds = array<i64: 8, 32>}, {pipeline_mode = #tpu.pipeline_mode<synchronous>, transform_indices = @transform_6, window_bounds = array<i64: 8, 32>}, {pipeline_mode = #tpu.pipeline_mode<synchronous>, transform_indices = @transform_7, window_bounds = array<i64: 128, 64>}, {transform_indices = @transform_8, window_bounds = array<i64: 32, 128>}, {transform_indices = @transform_9, window_bounds = array<i64: 8, 128>}]} {
    %c0 = arith.constant 0 : index
    %c0_0 = arith.constant 0 : index
    %0 = vector.load %arg1[%c0, %c0_0] : memref<32x64xf32, #tpu.memory_space<vmem>>, vector<32x64xf32>
    %c0_1 = arith.constant 0 : index
    %c0_2 = arith.constant 0 : index
    %1 = vector.load %arg4[%c0_1, %c0_2] : memref<64x128xf32, #tpu.memory_space<vmem>>, vector<64x128xf32>
    %cst = arith.constant dense<0.000000e+00> : vector<32x128xf32>
    %2 = tpu.matmul %0, %1, %cst {dimension_numbers = #tpu.dot_dimension_numbers<[1], [0], [0], [1], [0, 0, 1, 1], [], []>} : vector<32x64xf32>, vector<64x128xf32>, vector<32x128xf32> -> vector<32x128xf32>
    %c0_3 = arith.constant 0 : index
    %c0_4 = arith.constant 0 : index
    %3 = vector.load %arg5[%c0_3, %c0_4] : memref<8x128xf32, #tpu.memory_space<vmem>>, vector<1x128xf32>
    %4 = vector.broadcast %3 : vector<1x128xf32> to vector<32x128xf32>
    %5 = arith.addf %2, %4 : vector<32x128xf32>
    %cst_5 = arith.constant 0.000000e+00 : f32
    %6 = vector.broadcast %cst_5 : f32 to vector<32x128xf32>
    %7 = arith.maximumf %5, %6 : vector<32x128xf32>
    %c0_6 = arith.constant 0 : index
    %c0_7 = arith.constant 0 : index
    %8 = vector.load %arg2[%c0_6, %c0_7] : memref<32x128xf32, #tpu.memory_space<vmem>>, vector<32x128xf32>
    %c3 = arith.constant 3 : index
    %c0_8 = arith.constant 0 : index
    %9 = vector.load %arg5[%c3, %c0_8] : memref<8x128xf32, #tpu.memory_space<vmem>>, vector<1x128xf32>
    %10 = vector.broadcast %9 : vector<1x128xf32> to vector<32x128xf32>
    %11 = arith.addf %8, %10 : vector<32x128xf32>
    %cst_9 = arith.constant 0.000000e+00 : f32
    %12 = vector.broadcast %cst_9 : f32 to vector<32x128xf32>
    %13 = arith.maximumf %11, %12 : vector<32x128xf32>
    %14 = arith.addf %7, %13 : vector<32x128xf32>
    %c0_10 = arith.constant 0 : index
    %c0_11 = arith.constant 0 : index
    %15 = vector.load %arg3[%c0_10, %c0_11] : memref<32x128xf32, #tpu.memory_space<vmem>>, vector<32x128xf32>
    %16 = arith.addf %15, %14 : vector<32x128xf32>
    %c1 = arith.constant 1 : index
    %c0_12 = arith.constant 0 : index
    %17 = vector.load %arg5[%c1, %c0_12] : memref<8x128xf32, #tpu.memory_space<vmem>>, vector<1x128xf32>
    %18 = vector.broadcast %17 : vector<1x128xf32> to vector<32x128xf32>
    %19 = arith.mulf %16, %18 : vector<32x128xf32>
    %c2 = arith.constant 2 : index
    %c0_13 = arith.constant 0 : index
    %20 = vector.load %arg5[%c2, %c0_13] : memref<8x128xf32, #tpu.memory_space<vmem>>, vector<1x128xf32>
    %21 = vector.broadcast %20 : vector<1x128xf32> to vector<32x128xf32>
    %22 = arith.addf %19, %21 : vector<32x128xf32>
    %c0_14 = arith.constant 0 : index
    %c0_15 = arith.constant 0 : index
    %23 = vector.load %arg9[%c0_14, %c0_15] : memref<32x128xf32, #tpu.memory_space<vmem>>, vector<32x128xf32>
    tpu.vector_store %arg9[%c0_14, %c0_15], %22 {strides = array<i32>} : memref<32x128xf32, #tpu.memory_space<vmem>>, vector<32x128xf32>,
    %c0_16 = arith.constant 0 : index
    %c0_17 = arith.constant 0 : index
    %24 = vector.load %arg8[%c0_16, %c0_17] : memref<128x64xf32, #tpu.memory_space<vmem>>, vector<128x64xf32>
    %cst_18 = arith.constant dense<0.000000e+00> : vector<32x64xf32>
    %25 = tpu.matmul %16, %24, %cst_18 {dimension_numbers = #tpu.dot_dimension_numbers<[1], [0], [0], [1], [0, 0, 1, 1], [], []>} : vector<32x128xf32>, vector<128x64xf32>, vector<32x64xf32> -> vector<32x64xf32>
    %c0_19 = arith.constant 0 : index
    %c0_20 = arith.constant 0 : index
    %26 = vector.load %arg6[%c0_19, %c0_20] : memref<8x32xf32, #tpu.memory_space<vmem>>, vector<8x32xf32>
    %cst_21 = arith.constant dense<0.000000e+00> : vector<8x64xf32>
    %27 = tpu.matmul %26, %25, %cst_21 {dimension_numbers = #tpu.dot_dimension_numbers<[1], [0], [0], [1], [0, 0, 1, 1], [], []>} : vector<8x32xf32>, vector<32x64xf32>, vector<8x64xf32> -> vector<8x64xf32>
    %c0_22 = arith.constant 0 : index
    %c0_23 = arith.constant 0 : index
    %28 = vector.load %arg7[%c0_22, %c0_23] : memref<8x32xf32, #tpu.memory_space<vmem>>, vector<8x32xf32>
    %cst_24 = arith.constant dense<0.000000e+00> : vector<8x64xf32>
    %29 = tpu.matmul %28, %25, %cst_24 {dimension_numbers = #tpu.dot_dimension_numbers<[1], [0], [0], [1], [0, 0, 1, 1], [], []>} : vector<8x32xf32>, vector<32x64xf32>, vector<8x64xf32> -> vector<8x64xf32>
    %c0_25 = arith.constant 0 : index
    %c0_26 = arith.constant 0 : index
    %30 = vector.load %arg10[%c0_25, %c0_26] : memref<8x128xf32, #tpu.memory_space<vmem>>, vector<8x64xf32>
    tpu.vector_store %arg10[%c0_25, %c0_26], %27 {strides = array<i32>} : memref<8x128xf32, #tpu.memory_space<vmem>>, vector<8x64xf32>,
    %c0_27 = arith.constant 0 : index
    %c64 = arith.constant 64 : index
    %31 = vector.load %arg10[%c0_27, %c64] : memref<8x128xf32, #tpu.memory_space<vmem>>, vector<8x64xf32>
    tpu.vector_store %arg10[%c0_27, %c64], %29 {strides = array<i32>} : memref<8x128xf32, #tpu.memory_space<vmem>>, vector<8x64xf32>,
    return
  }
  func.func @transform_0(%arg0: i32) -> (i32, i32) {
    %c0_i32 = arith.constant 0 : i32
    %c0_i32_0 = arith.constant 0 : i32
    return %arg0, %c0_i32 : i32, i32
  }
  func.func @transform_1(%arg0: i32) -> (i32, i32) {
    %c0_i32 = arith.constant 0 : i32
    %c0_i32_0 = arith.constant 0 : i32
    return %arg0, %c0_i32 : i32, i32
  }
  func.func @transform_2(%arg0: i32) -> (i32, i32) {
    %c0_i32 = arith.constant 0 : i32
    %c0_i32_0 = arith.constant 0 : i32
    return %arg0, %c0_i32 : i32, i32
  }
  func.func @transform_3(%arg0: i32) -> (i32, i32) {
    %c0_i32 = arith.constant 0 : i32
    %c0_i32_0 = arith.constant 0 : i32
    %c0_i32_1 = arith.constant 0 : i32
    return %c0_i32, %c0_i32_0 : i32, i32
  }
  func.func @transform_4(%arg0: i32) -> (i32, i32) {
    %c0_i32 = arith.constant 0 : i32
    %c0_i32_0 = arith.constant 0 : i32
    %c0_i32_1 = arith.constant 0 : i32
    return %c0_i32, %c0_i32_0 : i32, i32
  }
  func.func @transform_5(%arg0: i32) -> (i32, i32) {
    %c0_i32 = arith.constant 0 : i32
    %c0_i32_0 = arith.constant 0 : i32
    %c0_i32_1 = arith.constant 0 : i32
    return %c0_i32, %c0_i32_0 : i32, i32
  }
  func.func @transform_6(%arg0: i32) -> (i32, i32) {
    %c0_i32 = arith.constant 0 : i32
    %c0_i32_0 = arith.constant 0 : i32
    %c0_i32_1 = arith.constant 0 : i32
    return %c0_i32, %c0_i32_0 : i32, i32
  }
  func.func @transform_7(%arg0: i32) -> (i32, i32) {
    %c0_i32 = arith.constant 0 : i32
    %c0_i32_0 = arith.constant 0 : i32
    %c0_i32_1 = arith.constant 0 : i32
    return %c0_i32, %c0_i32_0 : i32, i32
  }
  func.func @transform_8(%arg0: i32) -> (i32, i32) {
    %c0_i32 = arith.constant 0 : i32
    %c0_i32_0 = arith.constant 0 : i32
    return %arg0, %c0_i32 : i32, i32
  }
  func.func @transform_9(%arg0: i32) -> (i32, i32) {
    %c0_i32 = arith.constant 0 : i32
    %c0_i32_0 = arith.constant 0 : i32
    return %arg0, %c0_i32 : i32, i32
  }
}

</mosaic_0001>

<llo_original>
// kernel: tile.33
$region0: #{tile.33}
  #allocation0 [shape = 's32[1]{0}', space=sflag, size = 0x4, scoped, tag = 'scoped memory for tile.33']
  %s0 = inlined_call_operand.vmem [shape: f32[8], index: 0, kind: input, shape index: {}]
  %s1 = inlined_call_operand.vmem [shape: f32[16,8], index: 1, kind: output, shape index: {}]
  // Predicated region
  $region2: #{tile.33} parent=0 // pred_check
    _
  $region3: #{tile.33} parent=0 // pred_check_branch
    %3 = sbr.rel (0) target = $region5
  $region4: #{tile.33} parent=0 // pred_region
    _
  $region5: #{tile.33} parent=0 // pred_fallthru
    _
  %v4 = vld [vmem:[%s0] ss:$0 sm:$0xff]
  %5 = vst [vmem:[%s1] sm:$0xff] %v4
  %s6 = scalar_lea.vmem %s1, 8
  %7 = vst [vmem:[%s6] sm:$0xff] %v4

// kernel: block_lite_lite_forward.1
$region0: #{block_lite_lite_forward.1}
  #allocation0 [shape = 'u32[]', space=smem, size = 0x4, offset = 0x4, fixed_abs, tag = 'smem constant byte address 0x4 - core index']
  #allocation1 [shape = 'u32[72,128]{1,0:T(1,128)}', space=vmem, size = 0x9000, scoped, tag = 'internal scratch']
  %s0 = inlined_call_operand.vmem [shape: f32[32,64], index: 0, kind: input, shape index: {}]
  %s1 = inlined_call_operand.vmem [shape: f32[32,128], index: 1, kind: input, shape index: {}]
  %s2 = inlined_call_operand.vmem [shape: f32[32,128], index: 2, kind: input, shape index: {}]
  %s3 = inlined_call_operand.vmem [shape: f32[64,128], index: 3, kind: input, shape index: {}]
  %s4 = inlined_call_operand.vmem [shape: f32[8,128], index: 4, kind: input, shape index: {}]
  %s5 = inlined_call_operand.vmem [shape: f32[8,32], index: 5, kind: input, shape index: {}]
  %s6 = inlined_call_operand.vmem [shape: f32[8,32], index: 6, kind: input, shape index: {}]
  %s7 = inlined_call_operand.vmem [shape: f32[128,64], index: 7, kind: input, shape index: {}]
  %s8 = inlined_call_operand.vmem [shape: f32[32,128], index: 8, kind: output, shape index: {0}]
  %s9 = inlined_call_operand.vmem [shape: f32[8,128], index: 9, kind: output, shape index: {1}]
  %10 = xla_tuple %s8, %s9
  %s11 = sld [smem:[#allocation0]]
  $region50: #{block_lite_lite_forward.1} parent=0
    _
  %s13 = ssub.s32 1, %s11
  %s14 = scalar_select 0, %s13, %s11
  // Predicated region
  $region2: #{block_lite_lite_forward.1} parent=0 // pred_check
    _
  $region3: #{block_lite_lite_forward.1} parent=0 // pred_check_branch
    %16 = sbr.rel (0) target = $region5
  $region4: #{block_lite_lite_forward.1} parent=0 // pred_region
    _
  $region5: #{block_lite_lite_forward.1} parent=0 // pred_fallthru
    _
  // Predicated region
  $region6: #{block_lite_lite_forward.1} parent=0 // pred_check
    _
  $region7: #{block_lite_lite_forward.1} parent=0 // pred_check_branch
    %18 = sbr.rel (0) target = $region9
  $region8: #{block_lite_lite_forward.1} parent=0 // pred_region
    _
  $region9: #{block_lite_lite_forward.1} parent=0 // pred_fallthru
    _
  // Predicated region
  $region10: #{block_lite_lite_forward.1} parent=0 // pred_check
    _
  $region11: #{block_lite_lite_forward.1} parent=0 // pred_check_branch
    %20 = sbr.rel (0) target = $region13
  $region12: #{block_lite_lite_forward.1} parent=0 // pred_region
    _
  $region13: #{block_lite_lite_forward.1} parent=0 // pred_fallthru
    _
  // Predicated region
  $region14: #{block_lite_lite_forward.1} parent=0 // pred_check
    _
  $region15: #{block_lite_lite_forward.1} parent=0 // pred_check_branch
    %22 = sbr.rel (0) target = $region17
  $region16: #{block_lite_lite_forward.1} parent=0 // pred_region
    _
  $region17: #{block_lite_lite_forward.1} parent=0 // pred_fallthru
    _
  // Predicated region
  $region18: #{block_lite_lite_forward.1} parent=0 // pred_check
    _
  $region19: #{block_lite_lite_forward.1} parent=0 // pred_check_branch
    %24 = sbr.rel (0) target = $region21
  $region20: #{block_lite_lite_forward.1} parent=0 // pred_region
    _
  $region21: #{block_lite_lite_forward.1} parent=0 // pred_fallthru
    _
  // Predicated region
  $region22: #{block_lite_lite_forward.1} parent=0 // pred_check
    _
  $region23: #{block_lite_lite_forward.1} parent=0 // pred_check_branch
    %26 = sbr.rel (0) target = $region25
  $region24: #{block_lite_lite_forward.1} parent=0 // pred_region
    _
  $region25: #{block_lite_lite_forward.1} parent=0 // pred_fallthru
    _
  // Predicated region
  $region26: #{block_lite_lite_forward.1} parent=0 // pred_check
    _
  $region27: #{block_lite_lite_forward.1} parent=0 // pred_check_branch
    %28 = sbr.rel (0) target = $region29
  $region28: #{block_lite_lite_forward.1} parent=0 // pred_region
    _
  $region29: #{block_lite_lite_forward.1} parent=0 // pred_fallthru
    _
  // Predicated region
  $region30: #{block_lite_lite_forward.1} parent=0 // pred_check
    _
  $region31: #{block_lite_lite_forward.1} parent=0 // pred_check_branch
    %30 = sbr.rel (0) target = $region33
  $region32: #{block_lite_lite_forward.1} parent=0 // pred_region
    _
  $region33: #{block_lite_lite_forward.1} parent=0 // pred_fallthru
    _
  %v31 = vld [vmem:[%s0] sm:$0xff]
  %v32 = vld [vmem:[%s0 + $0x8] sm:$0xff]
  %v33 = vld [vmem:[%s0 + $0x10] sm:$0xff]
  %v34 = vld [vmem:[%s0 + $0x18] sm:$0xff]
  %v35 = vld [vmem:[%s3] sm:$0xff]
  %v36 = vld [vmem:[%s3 + $0x8] sm:$0xff]
  %v37 = vld [vmem:[%s3 + $0x10] sm:$0xff]
  %v38 = vld [vmem:[%s3 + $0x18] sm:$0xff]
  %v39 = vld [vmem:[%s3 + $0x20] sm:$0xff]
  %v40 = vld [vmem:[%s3 + $0x28] sm:$0xff]
  %v41 = vld [vmem:[%s3 + $0x30] sm:$0xff]
  %v42 = vld [vmem:[%s3 + $0x38] sm:$0xff]
  %v43 = vld [vmem:[%s4] sm:$0x1]
  %v44 = vperm.slane %v43, 0
  %vm45 = vcmask 523264
  %v47 = vsel %vm45, %v31, 0
  %v50 = vsel %vm45, %v32, 0
  %v53 = vsel %vm45, %v33, 0
  %v56 = vsel %vm45, %v34, 0
  %58 = vmatpush.msra.mxu0 0.0
  %59 = vmatpush.msra.mxu0 0.0
  %60 = vmatpush.msra.mxu0 0.0
  %61 = vmatpush.msra.mxu0 0.0
  %62 = vmatpush.msra.mxu0 0.0
  %63 = vmatpush.msra.mxu0 0.0
  %64 = vmatpush.msra.mxu0 0.0
  %65 = vmatpush.msra.mxu0 0.0
  %66 = vmatpush.msra.mxu0 %v42
  %67 = vmatpush.msra.mxu0 %v41
  %68 = vmatpush.msra.mxu0 %v40
  %69 = vmatpush.msra.mxu0 %v39
  %70 = vmatpush.msra.mxu0 %v38
  %71 = vmatpush.msra.mxu0 %v37
  %72 = vmatpush.msra.mxu0 %v36
  %73 = vmatpush.msra.mxu0 %v35
  %74 = vmatmul.f32.gmra.mxu0 %v47
  %v75 = vpop.f32.mrf.mxu0
  %v76 = vadd.f32 %v44, %v75
  %77 = vmatmul.f32.gmra.mxu0 %v50
  %v78 = vpop.f32.mrf.mxu0
  %v79 = vadd.f32 %v44, %v78
  %80 = vmatmul.f32.gmra.mxu0 %v53
  %v81 = vpop.f32.mrf.mxu0
  %v82 = vadd.f32 %v44, %v81
  %83 = vmatmul.f32.gmra.mxu0 %v56
  %v84 = vpop.f32.mrf.mxu0
  %v85 = vadd.f32 %v44, %v84
  %86 = vdwg.mxu0
  %v87 = vmax.f32 %v76, 0.0
  %v88 = vmax.f32 %v79, 0.0
  %v89 = vmax.f32 %v82, 0.0
  %v90 = vmax.f32 %v85, 0.0
  %v91 = vld [vmem:[%s1] sm:$0xff]
  %v92 = vld [vmem:[%s1 + $0x8] sm:$0xff]
  %v93 = vld [vmem:[%s1 + $0x10] sm:$0xff]
  %v94 = vld [vmem:[%s1 + $0x18] sm:$0xff]
  %v95 = vld [vmem:[%s4 + $0x3] sm:$0x1]
  %v96 = vperm.slane %v95, 0
  %v97 = vadd.f32 %v91, %v96
  %v98 = vadd.f32 %v92, %v96
  %v99 = vadd.f32 %v93, %v96
  %v100 = vadd.f32 %v94, %v96
  %v101 = vmax.f32 %v97, 0.0
  %v102 = vmax.f32 %v98, 0.0
  %v103 = vmax.f32 %v99, 0.0
  %v104 = vmax.f32 %v100, 0.0
  %v105 = vadd.f32 %v87, %v101
  %v106 = vadd.f32 %v88, %v102
  %v107 = vadd.f32 %v89, %v103
  %v108 = vadd.f32 %v90, %v104
  %v109 = vld [vmem:[%s2] sm:$0xff]
  %v110 = vld [vmem:[%s2 + $0x8] sm:$0xff]
  %v111 = vld [vmem:[%s2 + $0x10] sm:$0xff]
  %v112 = vld [vmem:[%s2 + $0x18] sm:$0xff]
  %v113 = vadd.f32 %v109, %v105
  %v114 = vadd.f32 %v110, %v106
  %v115 = vadd.f32 %v111, %v107
  %v116 = vadd.f32 %v112, %v108
  %v117 = vld [vmem:[%s4 + $0x1] sm:$0x1]
  %v118 = vperm.slane %v117, 0
  %v119 = vmul.f32 %v113, %v118
  %v120 = vmul.f32 %v114, %v118
  %v121 = vmul.f32 %v115, %v118
  %v122 = vmul.f32 %v116, %v118
  %v123 = vld [vmem:[%s4 + $0x2] sm:$0x1]
  %v124 = vperm.slane %v123, 0
  %v125 = vadd.f32 %v119, %v124
  %v126 = vadd.f32 %v120, %v124
  %v127 = vadd.f32 %v121, %v124
  %v128 = vadd.f32 %v122, %v124
  %129 = vst [vmem:[%s8] sm:$0xff] %v125
  %130 = vst [vmem:[%s8 + $0x8] sm:$0xff] %v126
  %131 = vst [vmem:[%s8 + $0x10] sm:$0xff] %v127
  %132 = vst [vmem:[%s8 + $0x18] sm:$0xff] %v128
  %v133 = vld [vmem:[%s7] sm:$0xff]
  %v134 = vld [vmem:[%s7 + $0x8] sm:$0xff]
  %v135 = vld [vmem:[%s7 + $0x10] sm:$0xff]
  %v136 = vld [vmem:[%s7 + $0x18] sm:$0xff]
  %v137 = vld [vmem:[%s7 + $0x20] sm:$0xff]
  %v138 = vld [vmem:[%s7 + $0x28] sm:$0xff]
  %v139 = vld [vmem:[%s7 + $0x30] sm:$0xff]
  %v140 = vld [vmem:[%s7 + $0x38] sm:$0xff]
  %v141 = vld [vmem:[%s7 + $0x40] sm:$0xff]
  %v142 = vld [vmem:[%s7 + $0x48] sm:$0xff]
  %v143 = vld [vmem:[%s7 + $0x50] sm:$0xff]
  %v144 = vld [vmem:[%s7 + $0x58] sm:$0xff]
  %v145 = vld [vmem:[%s7 + $0x60] sm:$0xff]
  %v146 = vld [vmem:[%s7 + $0x68] sm:$0xff]
  %v147 = vld [vmem:[%s7 + $0x70] sm:$0xff]
  %v148 = vld [vmem:[%s7 + $0x78] sm:$0xff]
  %149 = vmatpush.msra.mxu0 %v148
  %150 = vmatpush.msra.mxu0 %v147
  %151 = vmatpush.msra.mxu0 %v146
  %152 = vmatpush.msra.mxu0 %v145
  %153 = vmatpush.msra.mxu0 %v144
  %154 = vmatpush.msra.mxu0 %v143
  %155 = vmatpush.msra.mxu0 %v142
  %156 = vmatpush.msra.mxu0 %v141
  %157 = vmatpush.msra.mxu0 %v140
  %158 = vmatpush.msra.mxu0 %v139
  %159 = vmatpush.msra.mxu0 %v138
  %160 = vmatpush.msra.mxu0 %v137
  %161 = vmatpush.msra.mxu0 %v136
  %162 = vmatpush.msra.mxu0 %v135
  %163 = vmatpush.msra.mxu0 %v134
  %164 = vmatpush.msra.mxu0 %v133
  %165 = vmatmul.f32.gmra.mxu0 %v113
  %v166 = vpop.f32.mrf.mxu0
  %v167 = vadd.f32 0.0, %v166
  %168 = vmatmul.f32.gmra.mxu0 %v114
  %v169 = vpop.f32.mrf.mxu0
  %v170 = vadd.f32 0.0, %v169
  %171 = vmatmul.f32.gmra.mxu0 %v115
  %v172 = vpop.f32.mrf.mxu0
  %v173 = vadd.f32 0.0, %v172
  %174 = vmatmul.f32.gmra.mxu0 %v116
  %v175 = vpop.f32.mrf.mxu0
  %v176 = vadd.f32 0.0, %v175
  %177 = vdwg.mxu0
  %v178 = vld [vmem:[%s5] sm:$0xff]
  %vm179 = vcmask 261120
  %v181 = vsel %vm179, %v178, 0
  %183 = vmatpush.msra.mxu0 0.0
  %184 = vmatpush.msra.mxu0 0.0
  %185 = vmatpush.msra.mxu0 0.0
  %186 = vmatpush.msra.mxu0 0.0
  %187 = vmatpush.msra.mxu0 0.0
  %188 = vmatpush.msra.mxu0 0.0
  %189 = vmatpush.msra.mxu0 0.0
  %190 = vmatpush.msra.mxu0 0.0
  %191 = vmatpush.msra.mxu0 0.0
  %192 = vmatpush.msra.mxu0 0.0
  %193 = vmatpush.msra.mxu0 0.0
  %194 = vmatpush.msra.mxu0 0.0
  %195 = vmatpush.msra.mxu0 %v176
  %196 = vmatpush.msra.mxu0 %v173
  %197 = vmatpush.msra.mxu0 %v170
  %198 = vmatpush.msra.mxu0 %v167
  %199 = vmatmul.f32.gmra.mxu0 %v181
  %v200 = vpop.f32.mrf.mxu0
  %v201 = vadd.f32 0.0, %v200
  %202 = vdwg.mxu0
  %v203 = vld [vmem:[%s6] sm:$0xff]
  %v205 = vsel %vm179, %v203, 0
  %207 = vmatpush.msra.mxu0 0.0
  %208 = vmatpush.msra.mxu0 0.0
  %209 = vmatpush.msra.mxu0 0.0
  %210 = vmatpush.msra.mxu0 0.0
  %211 = vmatpush.msra.mxu0 0.0
  %212 = vmatpush.msra.mxu0 0.0
  %213 = vmatpush.msra.mxu0 0.0
  %214 = vmatpush.msra.mxu0 0.0
  %215 = vmatpush.msra.mxu0 0.0
  %216 = vmatpush.msra.mxu0 0.0
  %217 = vmatpush.msra.mxu0 0.0
  %218 = vmatpush.msra.mxu0 0.0
  %219 = vmatpush.msra.mxu0 %v176
  %220 = vmatpush.msra.mxu0 %v173
  %221 = vmatpush.msra.mxu0 %v170
  %222 = vmatpush.msra.mxu0 %v167
  %223 = vmatmul.f32.gmra.mxu0 %v205
  %v224 = vpop.f32.mrf.mxu0
  %v225 = vadd.f32 0.0, %v224
  %226 = vdwg.mxu0
  %227 = vst.msk [vmem:[%s9] sm:$0xff] %vm45, %v201
  %229 = vrot.lane.b32.xlu0 %v225, 64
  %v230 = vpop.permute.xlu0 %229
  %vm232 = vcmask 1048064
  %233 = vst.msk [vmem:[%s9] sm:$0xff] %vm232, %v230
  // Predicated region
  $region34: #{block_lite_lite_forward.1} parent=0 // pred_check
    _
  $region35: #{block_lite_lite_forward.1} parent=0 // pred_check_branch
    %235 = sbr.rel (0) target = $region37
  $region36: #{block_lite_lite_forward.1} parent=0 // pred_region
    _
  $region37: #{block_lite_lite_forward.1} parent=0 // pred_fallthru
    _
  // Predicated region
  $region38: #{block_lite_lite_forward.1} parent=0 // pred_check
    _
  $region39: #{block_lite_lite_forward.1} parent=0 // pred_check_branch
    %237 = sbr.rel (0) target = $region41
  $region40: #{block_lite_lite_forward.1} parent=0 // pred_region
    _
  $region41: #{block_lite_lite_forward.1} parent=0 // pred_fallthru
    _
  // Predicated region
  $region42: #{block_lite_lite_forward.1} parent=0 // pred_check
    _
  $region43: #{block_lite_lite_forward.1} parent=0 // pred_check_branch
    %239 = sbr.rel (0) target = $region45
  $region44: #{block_lite_lite_forward.1} parent=0 // pred_region
    _
  $region45: #{block_lite_lite_forward.1} parent=0 // pred_fallthru
    _
  // Predicated region
  $region46: #{block_lite_lite_forward.1} parent=0 // pred_check
    _
  $region47: #{block_lite_lite_forward.1} parent=0 // pred_check_branch
    %241 = sbr.rel (0) target = $region49
  $region48: #{block_lite_lite_forward.1} parent=0 // pred_region
    _
  $region49: #{block_lite_lite_forward.1} parent=0 // pred_fallthru
    _

</llo_original>
